<compile_context>
chip_gen: v7x
topology: tpu7x:2x2x1
jax: 0.10.0
libtpu: 0.0.40
codegen_flags: <defaults>
</compile_context>

<pallas_src>
import functools

import jax
import jax.numpy as jnp
from jax.experimental import pallas as pl
from jax.experimental.pallas import tpu as pltpu

K = 5  # 5x5 blur / delta kernels (fixed by the module's __init__)


def _std_loss_kernel(x_ref, out_ref, *scratch, C, H, W, scale, nb):
    acc_ref = scratch[0] if scratch else None
    b = pl.program_id(1)

    Ho = H - (K - 1)
    Wo = W - (K - 1)

    # --- grayscale as a *raw* channel sum (the 1/C is folded into `scale`) ---
    x = x_ref[...].astype(jnp.float32)            # (B_TILE, C, H, W)
    gray = x[:, 0]
    for c in range(1, C):
        gray = gray + x[:, c]                     # (B_TILE, H, W)

    # --- separable 5x5 box *sum* (the 1/25 is folded into `scale`) -----------
    # row direction first (sublane shifts), then column direction (lane shifts)
    rows = gray[:, 0:Ho, :]
    for dy in range(1, K):
        rows = rows + gray[:, dy:dy + Ho, :]      # (B_TILE, Ho, W)
    box = rows[:, :, 0:Wo]
    for dx in range(1, K):
        box = box + rows[:, :, dx:dx + Wo]        # (B_TILE, Ho, Wo)

    # --- delta-kernel conv == valid center crop of the grayscale -------------
    center = gray[:, 2:2 + Ho, 2:2 + Wo]          # (B_TILE, Ho, Wo)

    # d = (K*K*C) * (center/C - box/(K*K*C)); `scale` carries 1/(K*K*C)^2.
    d = center * float(K * K) - box
    sq = d * d                                    # (B_TILE, Ho, Wo)

    if nb == 1:
        # Single grid step per core: reduce straight to the scalar output,
        # no VMEM accumulator traffic at all.
        total = jnp.sum(sq) * scale
        out_ref[...] = jnp.broadcast_to(total, (1, 1, 1)).astype(jnp.float32)
    else:
        @pl.when(b == 0)
        def _first():
            acc_ref[...] = sq                     # write, no zero-fill + add

        @pl.when(b > 0)
        def _accum():
            acc_ref[...] = acc_ref[...] + sq      # pure VALU, no per-step reduce

        @pl.when(b == nb - 1)
        def _finalize():
            total = jnp.sum(acc_ref[...]) * scale  # single reduce per core
            out_ref[...] = jnp.broadcast_to(total, (1, 1, 1)).astype(jnp.float32)


def _largest_divisor_leq(n, cap):
    for d in range(min(n, cap), 0, -1):
        if n % d == 0:
            return d
    return 1


def std_loss(x, *, b_tile=None):
    """x: (N, C, H, W) array. Returns the scalar float32 StdLoss."""
    N, C, H, W = x.shape
    if H < K or W < K:
        raise ValueError(f"spatial dims must be >= {K}, got {(H, W)}")
    Ho, Wo = H - (K - 1), W - (K - 1)

    # 2-way batch split on a leading "parallel" grid axis (uses both
    # TensorCores on v7x; no effect on single-core v5e/v6e).
    P = 2 if (N % 2 == 0 and N >= 2) else 1
    Np = N // P

    if b_tile is None:
        # Pack several images per grid step, bounded by a VMEM budget
        # (the input block is double-buffered by the pipeline).
        budget = 8 * 1024 * 1024
        per_img = C * H * W * x.dtype.itemsize
        cap = max(1, min(8, budget // max(per_img, 1)))
        b_tile = _largest_divisor_leq(Np, int(cap))
    if Np % b_tile != 0:
        raise ValueError("b_tile must divide N // P")
    nb = Np // b_tile
    # TODO(synk): for very large images, tile H into row bands with a 4-row
    # halo (and pack/transpose narrow W<128 images lane-dense) instead of
    # keeping a whole (C, H, W) image resident per block.

    n_total = N * Ho * Wo                         # element count of MSELoss
    scale = 1.0 / (float(K * K * C) ** 2 * float(n_total))

    kernel = functools.partial(_std_loss_kernel, C=C, H=H, W=W,
                               scale=scale, nb=nb)

    scratch_shapes = [] if nb == 1 else [pltpu.VMEM((b_tile, Ho, Wo),
                                                    jnp.float32)]

    partials = pl.pallas_call(
        kernel,
        out_shape=jax.ShapeDtypeStruct((P, 1, 1), jnp.float32),
        grid_spec=pltpu.PrefetchScalarGridSpec(
            num_scalar_prefetch=0,
            grid=(P, nb),
            in_specs=[pl.BlockSpec(
                (b_tile, C, H, W),
                lambda p, b, nb=nb: (p * nb + b, 0, 0, 0))],
            out_specs=pl.BlockSpec((1, 1, 1), lambda p, b: (p, 0, 0)),
            scratch_shapes=scratch_shapes,
        ),
        compiler_params=pltpu.CompilerParams(
            dimension_semantics=("parallel", "arbitrary"),
            vmem_limit_bytes=64 * 1024 * 1024,
        ),
    )(x)
    return jnp.sum(partials)


def std_loss_ref(x):
    """Pure-JAX reference (mirrors the PyTorch forward exactly)."""
    gray = jnp.mean(x.astype(jnp.float32), axis=1, keepdims=True)
    _, _, H, W = gray.shape
    Ho, Wo = H - (K - 1), W - (K - 1)
    center = gray[:, :, 2:2 + Ho, 2:2 + Wo]
    blur = jnp.zeros_like(center)
    for dy in range(K):
        for dx in range(K):
            blur = blur + gray[:, :, dy:dy + Ho, dx:dx + Wo]
    blur = blur / (K * K)
    return jnp.mean((center - blur) ** 2)


if __name__ == "__main__":
    # Primary test case (small shapes consistent with the module).
    x = jax.random.normal(jax.random.PRNGKey(0), (2, 4, 16, 16),
                          dtype=jnp.float32)
    loss = jax.block_until_ready(std_loss(x))
    ref = jax.block_until_ready(std_loss_ref(x))
    assert jnp.allclose(loss, ref, rtol=1e-4, atol=1e-6), (loss, ref)

    # Extra validation: multi-step accumulation (nb > 1) and B_TILE > 1 paths.
    x2 = jax.random.normal(jax.random.PRNGKey(1), (4, 3, 16, 16),
                           dtype=jnp.float32)
    ref2 = jax.block_until_ready(std_loss_ref(x2))
    loss2 = jax.block_until_ready(std_loss(x2, b_tile=1))   # nb = 2 per core
    assert jnp.allclose(loss2, ref2, rtol=1e-4, atol=1e-6), (loss2, ref2)
    loss3 = jax.block_until_ready(std_loss(x2))             # B_TILE = 2 per core
    assert jnp.allclose(loss3, ref2, rtol=1e-4, atol=1e-6), (loss3, ref2)

    print("KERNEL_OK")
</pallas_src>

<mosaic_0001>
module attributes {stable_mosaic.version = 11 : i64} {
  func.func @_std_loss_kernel(%arg0: i32, %arg1: i32, %arg2: memref<1x4x16x16xf32, #tpu.memory_space<vmem>>, %arg3: memref<1x1x1xf32, #tpu.memory_space<vmem>>) attributes {dimension_semantics = [#tpu.dimension_semantics<parallel>, #tpu.dimension_semantics<arbitrary>], iteration_bounds = array<i64: 2, 1>, scalar_prefetch = 0 : i64, scratch_operands = 0 : i64, tpu.core_type = #tpu.core_type<tc>, window_params = [{transform_indices = @transform_0, window_bounds = array<i64: 1, 4, 16, 16>}, {transform_indices = @transform_1, window_bounds = array<i64: 1, 1, 1>}]} {
    %c0 = arith.constant 0 : index
    %c0_0 = arith.constant 0 : index
    %c0_1 = arith.constant 0 : index
    %c0_2 = arith.constant 0 : index
    %0 = vector.load %arg2[%c0, %c0_0, %c0_1, %c0_2] : memref<1x4x16x16xf32, #tpu.memory_space<vmem>>, vector<1x4x16x16xf32>
    %1 = vector.extract_strided_slice %0 {offsets = [0, 0, 0, 0], sizes = [1, 1, 16, 16], strides = [1, 1, 1, 1]} : vector<1x4x16x16xf32> to vector<1x1x16x16xf32>
    %2 = vector.shape_cast %1 : vector<1x1x16x16xf32> to vector<1x16x16xf32>
    %3 = vector.extract_strided_slice %0 {offsets = [0, 1, 0, 0], sizes = [1, 1, 16, 16], strides = [1, 1, 1, 1]} : vector<1x4x16x16xf32> to vector<1x1x16x16xf32>
    %4 = vector.shape_cast %3 : vector<1x1x16x16xf32> to vector<1x16x16xf32>
    %5 = arith.addf %2, %4 : vector<1x16x16xf32>
    %6 = vector.extract_strided_slice %0 {offsets = [0, 2, 0, 0], sizes = [1, 1, 16, 16], strides = [1, 1, 1, 1]} : vector<1x4x16x16xf32> to vector<1x1x16x16xf32>
    %7 = vector.shape_cast %6 : vector<1x1x16x16xf32> to vector<1x16x16xf32>
    %8 = arith.addf %5, %7 : vector<1x16x16xf32>
    %9 = vector.extract_strided_slice %0 {offsets = [0, 3, 0, 0], sizes = [1, 1, 16, 16], strides = [1, 1, 1, 1]} : vector<1x4x16x16xf32> to vector<1x1x16x16xf32>
    %10 = vector.shape_cast %9 : vector<1x1x16x16xf32> to vector<1x16x16xf32>
    %11 = arith.addf %8, %10 : vector<1x16x16xf32>
    %12 = vector.extract_strided_slice %11 {offsets = [0, 0, 0], sizes = [1, 12, 16], strides = [1, 1, 1]} : vector<1x16x16xf32> to vector<1x12x16xf32>
    %13 = vector.extract_strided_slice %11 {offsets = [0, 1, 0], sizes = [1, 12, 16], strides = [1, 1, 1]} : vector<1x16x16xf32> to vector<1x12x16xf32>
    %14 = arith.addf %12, %13 : vector<1x12x16xf32>
    %15 = vector.extract_strided_slice %11 {offsets = [0, 2, 0], sizes = [1, 12, 16], strides = [1, 1, 1]} : vector<1x16x16xf32> to vector<1x12x16xf32>
    %16 = arith.addf %14, %15 : vector<1x12x16xf32>
    %17 = vector.extract_strided_slice %11 {offsets = [0, 3, 0], sizes = [1, 12, 16], strides = [1, 1, 1]} : vector<1x16x16xf32> to vector<1x12x16xf32>
    %18 = arith.addf %16, %17 : vector<1x12x16xf32>
    %19 = vector.extract_strided_slice %11 {offsets = [0, 4, 0], sizes = [1, 12, 16], strides = [1, 1, 1]} : vector<1x16x16xf32> to vector<1x12x16xf32>
    %20 = arith.addf %18, %19 : vector<1x12x16xf32>
    %21 = vector.extract_strided_slice %20 {offsets = [0, 0, 0], sizes = [1, 12, 12], strides = [1, 1, 1]} : vector<1x12x16xf32> to vector<1x12x12xf32>
    %22 = vector.extract_strided_slice %20 {offsets = [0, 0, 1], sizes = [1, 12, 12], strides = [1, 1, 1]} : vector<1x12x16xf32> to vector<1x12x12xf32>
    %23 = arith.addf %21, %22 : vector<1x12x12xf32>
    %24 = vector.extract_strided_slice %20 {offsets = [0, 0, 2], sizes = [1, 12, 12], strides = [1, 1, 1]} : vector<1x12x16xf32> to vector<1x12x12xf32>
    %25 = arith.addf %23, %24 : vector<1x12x12xf32>
    %26 = vector.extract_strided_slice %20 {offsets = [0, 0, 3], sizes = [1, 12, 12], strides = [1, 1, 1]} : vector<1x12x16xf32> to vector<1x12x12xf32>
    %27 = arith.addf %25, %26 : vector<1x12x12xf32>
    %28 = vector.extract_strided_slice %20 {offsets = [0, 0, 4], sizes = [1, 12, 12], strides = [1, 1, 1]} : vector<1x12x16xf32> to vector<1x12x12xf32>
    %29 = arith.addf %27, %28 : vector<1x12x12xf32>
    %30 = vector.extract_strided_slice %11 {offsets = [0, 2, 2], sizes = [1, 12, 12], strides = [1, 1, 1]} : vector<1x16x16xf32> to vector<1x12x12xf32>
    %cst = arith.constant 2.500000e+01 : f32
    %31 = vector.broadcast %cst : f32 to vector<1x12x12xf32>
    %32 = arith.mulf %30, %31 : vector<1x12x12xf32>
    %33 = arith.subf %32, %29 : vector<1x12x12xf32>
    %34 = arith.mulf %33, %33 : vector<1x12x12xf32>
    %35 = vector.shape_cast %34 : vector<1x12x12xf32> to vector<1x1x12x12xf32>
    %cst_3 = arith.constant dense<0.000000e+00> : vector<1xf32>
    %36 = vector.multi_reduction <add>, %35, %cst_3 [1, 2, 3] : vector<1x1x12x12xf32> to vector<1xf32>
    %37 = vector.shape_cast %36 : vector<1xf32> to vector<1x1x1x1xf32>
    %38 = vector.extract %37[0, 0, 0, 0] : f32 from vector<1x1x1x1xf32>
    %cst_4 = arith.constant 3.47222226E-7 : f32
    %39 = arith.mulf %38, %cst_4 : f32
    %40 = vector.broadcast %39 : f32 to vector<1x1x1xf32>
    %c0_5 = arith.constant 0 : index
    %c0_6 = arith.constant 0 : index
    %c0_7 = arith.constant 0 : index
    %41 = vector.load %arg3[%c0_5, %c0_6, %c0_7] : memref<1x1x1xf32, #tpu.memory_space<vmem>>, vector<1x1x1xf32>
    tpu.vector_store %arg3[%c0_5, %c0_6, %c0_7], %40 {strides = array<i32>} : memref<1x1x1xf32, #tpu.memory_space<vmem>>, vector<1x1x1xf32>,
    return
  }
  func.func @transform_0(%arg0: i32, %arg1: i32) -> (i32, i32, i32, i32) {
    %c1_i32 = arith.constant 1 : i32
    %0 = arith.muli %arg0, %c1_i32 : i32
    %1 = arith.addi %0, %arg1 : i32
    %c0_i32 = arith.constant 0 : i32
    %c0_i32_0 = arith.constant 0 : i32
    %c0_i32_1 = arith.constant 0 : i32
    %c0_i32_2 = arith.constant 0 : i32
    return %1, %c0_i32, %c0_i32_0, %c0_i32_1 : i32, i32, i32, i32
  }
  func.func @transform_1(%arg0: i32, %arg1: i32) -> (i32, i32, i32) {
    %c0_i32 = arith.constant 0 : i32
    %c0_i32_0 = arith.constant 0 : i32
    %c0_i32_1 = arith.constant 0 : i32
    return %arg0, %c0_i32, %c0_i32_0 : i32, i32, i32
  }
}

</mosaic_0001>

<llo_original>
// kernel: tpu_custom_call.1
$region0: #{tpu_custom_call.1}
  #allocation0 [shape = 'u32[]', space=smem, size = 0x4, offset = 0x4, fixed_abs, tag = 'smem constant byte address 0x4 - core index']
  #allocation1 [shape = 'u32[144,128]{1,0:T(1,128)}', space=vmem, size = 0x12000, scoped, tag = 'internal scratch']
  %s0 = inlined_call_operand.hbm [shape: f32[2,4,16,16], index: 0, kind: input, shape index: {}]
  %s1 = inlined_call_operand.hbm [shape: f32[2,1,1], index: 1, kind: output, shape index: {}]
  %s2 = sld [smem:[#allocation0]]
  $region41: #{tpu_custom_call.1} parent=0
    _
  %s4 = ssub.s32 1, %s2
  %s5 = scalar_select 0, %s4, %s2
  $region1: #{tpu_custom_call.1} parent=0
    #allocation2 [shape = 'u8[65536]{0}', space=vmem, size = 0x10000, scoped, tag = 'input window, operand 0']
    #allocation3 [shape = 's32[2]{0}', space=sflag, size = 0x8, scoped, tag = 'scoped memory for tpu_custom_call.1']
    #allocation4 [shape = 's32[2]{0}', space=sflag, size = 0x8, scoped, tag = 'scoped memory for tpu_custom_call.1']
    #allocation5 [shape = 'u8[1024]{0}', space=vmem, size = 0x400, scoped, tag = 'output window, operand 0']
    %6 = vsyncpa [#allocation3], 0
    %s7 = scalar_lea.sflag [#allocation3], 1
    %8 = vsyncpa %s7, 0
    %9 = vsyncpa [#allocation4], 0
    %s10 = scalar_lea.sflag [#allocation4], 1
    %11 = vsyncpa %s10, 0
    loop: start=0, step=1, limit=4
    $region2: #{tpu_custom_call.1} parent=1 // loop_pre_header
      _
    $region3: #{tpu_custom_call.1} parent=1 // loop_header
      %s13 = sphi 0, %s17
      %p14 = scmp.ge.s32.totalorder %s13, 4
      %s20 = sphi 0, %s32
      %s21 = sphi 0, %s28
      %s22 = sphi 0, %s20
      %s23 = sphi 0, %s21
      %s24 = sphi 0, %s22
      %s25 = sphi 0, %s23
      %s37 = sphi 0, %s39
      %s40 = sphi 0, %s37
      %s41 = sphi 0, %s40
      %s57 = sphi 0, %s41
      %s63 = sphi 0, %s65
      %s66 = sphi 0, %s63
      %s67 = sphi 0, %s66
      %s83 = sphi 0, %s67
    $region4: #{tpu_custom_call.1} parent=1 // loop_header_branch
      %16 = sbr.rel (%p14) target = $region8
    $region5: #{tpu_custom_call.1} parent=1 // loop_body
      %s18 = ssub.s32 %s13, 1
      %s19 = ssub.s32 %s13, 2
      %s26 = sadd.s32 1, %s21
      %p27 = scmp.ge.s32.totalorder %s26, 1
      %s28 = scalar_select %p27, 0, %s26
      %s29 = sadd.s32 1, %s20
      %s30 = scalar_select %p27, %s29, %s20
      %p31 = scmp.ge.s32.totalorder %s30, 2
      %s32 = scalar_select %p31, 0, %s30
      %s33 = sadd.s32 %s20, %s21
      %s34 = sadd.s32 %s32, %s28
      %s35 = ssub.s32 %s33, %s34
      %p36 = scmp.eq.s32.totalorder %s35, 0
      %s38 = sadd.s32 %s37, 1
      %s39 = scalar_select %p36, %s37, %s38
      %p42 = pneg %p36
      %p43 = scmp.eq.s32.totalorder %s13, 1
      %p44 = por %p42, %p43
      %p45 = scmp.ne.s32.totalorder %s37, %s40
      %p46 = scmp.eq.s32.totalorder %s13, 0
      %p47 = por %p45, %p46
      %p48 = scmp.ne.s32.totalorder %s37, %s40
      %p49 = scmp.eq.s32.totalorder %s18, 1
      %p50 = por %p48, %p49
      %p51 = scmp.ne.s32.totalorder %s40, %s41
      %p52 = scmp.eq.s32.totalorder %s18, 0
      %p53 = por %p51, %p52
      %p54 = scmp.ne.s32.totalorder %s40, %s41
      %p55 = scmp.eq.s32.totalorder %s19, 1
      %p56 = por %p54, %p55
      %p58 = scmp.ne.s32.totalorder %s41, %s57
      %p59 = scmp.eq.s32.totalorder %s19, 0
      %p60 = por %p58, %p59
      %s61 = ssub.s32 %s20, %s32
      %p62 = scmp.eq.s32.totalorder %s61, 0
      %s64 = sadd.s32 %s63, 1
      %s65 = scalar_select %p62, %s63, %s64
      %p68 = pneg %p62
      %p69 = scmp.eq.s32.totalorder %s13, 1
      %p70 = por %p68, %p69
      %p71 = scmp.ne.s32.totalorder %s63, %s66
      %p72 = scmp.eq.s32.totalorder %s13, 0
      %p73 = por %p71, %p72
      %p74 = scmp.ne.s32.totalorder %s63, %s66
      %p75 = scmp.eq.s32.totalorder %s18, 1
      %p76 = por %p74, %p75
      %p77 = scmp.ne.s32.totalorder %s66, %s67
      %p78 = scmp.eq.s32.totalorder %s18, 0
      %p79 = por %p77, %p78
      %p80 = scmp.ne.s32.totalorder %s66, %s67
      %p81 = scmp.eq.s32.totalorder %s19, 1
      %p82 = por %p80, %p81
      %p84 = scmp.ne.s32.totalorder %s67, %s83
      %p85 = scmp.eq.s32.totalorder %s19, 0
      %p86 = por %p84, %p85
      %p87 = scmp.le.s32.totalorder 1, %s13
      %p88 = scmp.lt.s32.totalorder %s13, 3
      %p89 = pnand %p87, %p88
      %p90 = pneg %p89
      // Predicated region
      $region9: #{tpu_custom_call.1} parent=5 // pred_check
        _
      $region10: #{tpu_custom_call.1} parent=5 // pred_check_branch
        %92 = sbr.rel (%p89) target = $region12
      $region11: #{tpu_custom_call.1} parent=5 // pred_region
        %s93 = ssub.s32 %s13, 1
      $region12: #{tpu_custom_call.1} parent=5 // pred_fallthru
        _
      %p94 = scmp.lt.s32.totalorder %s13, 2
      // Predicated region
      $region13: #{tpu_custom_call.1} parent=5 // pred_check
        %p95 = pneg %p94
      $region14: #{tpu_custom_call.1} parent=5 // pred_check_branch
        %97 = sbr.rel (%p95) target = $region16
      $region15: #{tpu_custom_call.1} parent=5 // pred_region
        // Predicated region
        $region17: #{tpu_custom_call.1} parent=15 // pred_check
          %p98 = pneg %p47
        $region18: #{tpu_custom_call.1} parent=15 // pred_check_branch
          %100 = sbr.rel (%p98) target = $region20
        $region19: #{tpu_custom_call.1} parent=15 // pred_region
          %s101 = sand.u32 %s37, 1
          %s102 = scalar_lea.sflag [#allocation3], %s101
          %s103 = sand.u32 %s37, 1
          %s104 = smul.addr %s103, 64
          %s105 = scalar_lea.vmem [#allocation2], %s104
          %s106 = sadd.s32 %s20, %s21
          %s108 = ssub.s32 1024, 1024
          %109 = vsyncadd %s102, %s108
          %s110 = smul.addr %s106, 8
          %s111 = smul.addr %s110, 128
          %s112 = scalar_lea.hbm %s0, %s111
          %s113 = sshll.u32 %s105, 4
          %s114 = int_to_ptr.vmem [resolvable:$true] %s113
          %119 = dma.hbm_to_vmem [thread:$0]  %s112, 1024, %s114, %s102, 128, 128, 8
        $region20: #{tpu_custom_call.1} parent=15 // pred_fallthru
          _
      $region16: #{tpu_custom_call.1} parent=5 // pred_fallthru
        _
      %p120 = scmp.le.s32.totalorder 1, %s13
      %p121 = scmp.lt.s32.totalorder %s13, 3
      %p122 = pnand %p120, %p121
      %p123 = pneg %p122
      // Predicated region
      $region21: #{tpu_custom_call.1} parent=5 // pred_check
        _
      $region22: #{tpu_custom_call.1} parent=5 // pred_check_branch
        %125 = sbr.rel (%p122) target = $region24
      $region23: #{tpu_custom_call.1} parent=5 // pred_region
        %s126 = ssub.s32 %s13, 1
        %s127 = sand.u32 %s40, 1
        %s128 = scalar_lea.sflag [#allocation3], %s127
        %s129 = sand.u32 %s40, 1
        %s130 = smul.addr %s129, 64
        %s131 = scalar_lea.vmem [#allocation2], %s130
        // Predicated region
        $region25: #{tpu_custom_call.1} parent=23 // pred_check
          %p132 = pneg %p53
        $region26: #{tpu_custom_call.1} parent=23 // pred_check_branch
          %134 = sbr.rel (%p132) target = $region28
        $region27: #{tpu_custom_call.1} parent=23 // pred_region
          %135 = dma.done %s128, 1024
        $region28: #{tpu_custom_call.1} parent=23 // pred_fallthru
          _
        %s136 = sand.u32 %s40, 1
        %s137 = scalar_lea.sflag [#allocation3], %s136
        %s138 = sand.u32 %s40, 1
        %s139 = smul.addr %s138, 64
        %s140 = scalar_lea.vmem [#allocation2], %s139
        %p141 = pneg %p53
        %p142 = pneg %p50
        %p143 = pneg %p79
        %p144 = pneg %p76
        %s145 = sand.u32 %s66, 1
        %s146 = scalar_lea.sflag [#allocation4], %s145
        %s147 = sand.u32 %s66, 1
        %s148 = scalar_lea.vmem [#allocation5], %s147
        %s149 = sadd.s32 %s22, %s23
        %v150 = vld [vmem:[%s131] sm:$0xff]
        %v151 = vld [vmem:[%s131 + $0x8] sm:$0xff]
        %v152 = vld [vmem:[%s131 + $0x10] sm:$0xff]
        %v153 = vld [vmem:[%s131 + $0x18] sm:$0xff]
        %v154 = vld [vmem:[%s131 + $0x20] sm:$0xff]
        %v155 = vld [vmem:[%s131 + $0x28] sm:$0xff]
        %v156 = vld [vmem:[%s131 + $0x30] sm:$0xff]
        %v157 = vld [vmem:[%s131 + $0x38] sm:$0xff]
        %v158 = vadd.f32 %v150, %v152
        %v159 = vadd.f32 %v151, %v153
        %v160 = vadd.f32 %v158, %v154
        %v161 = vadd.f32 %v159, %v155
        %v162 = vadd.f32 %v160, %v156
        %v163 = vadd.f32 %v161, %v157
        %vm166 = vcmask 1046528
        %v167 = vrot.slane %v162, 1
        %v168 = vrot.slane %v163, 1
        %v169 = vsel %vm166, %v167, %v168
        %v172 = vadd.f32 %v162, %v169
        %v173 = vadd.f32 %v163, %v168
        %vm174 = vcmask 1045504
        %v175 = vrot.slane %v162, 2
        %v176 = vrot.slane %v163, 2
        %v177 = vsel %vm174, %v175, %v176
        %v180 = vadd.f32 %v172, %v177
        %v181 = vadd.f32 %v173, %v176
        %vm182 = vcmask 1044480
        %v183 = vrot.slane %v162, 3
        %v184 = vrot.slane %v163, 3
        %v185 = vsel %vm182, %v183, %v184
        %v188 = vadd.f32 %v180, %v185
        %v189 = vadd.f32 %v181, %v184
        %vm190 = vcmask 1043456
        %v191 = vrot.slane %v162, 4
        %v192 = vrot.slane %v163, 4
        %v193 = vsel %vm190, %v191, %v192
        %v196 = vadd.f32 %v188, %v193
        %v197 = vadd.f32 %v189, %v192
        %200 = vrot.lane.b32.xlu0 %v196, 127
        %v201 = vpop.permute.xlu0 %200
        %202 = vrot.lane.b32.xlu0 %v197, 127
        %v203 = vpop.permute.xlu0 %202
        %v206 = vadd.f32 %v196, %v201
        %v207 = vadd.f32 %v197, %v203
        %208 = vrot.lane.b32.xlu0 %v196, 126
        %v209 = vpop.permute.xlu0 %208
        %210 = vrot.lane.b32.xlu0 %v197, 126
        %v211 = vpop.permute.xlu0 %210
        %v214 = vadd.f32 %v206, %v209
        %v215 = vadd.f32 %v207, %v211
        %216 = vrot.lane.b32.xlu0 %v196, 125
        %v217 = vpop.permute.xlu0 %216
        %218 = vrot.lane.b32.xlu0 %v197, 125
        %v219 = vpop.permute.xlu0 %218
        %v222 = vadd.f32 %v214, %v217
        %v223 = vadd.f32 %v215, %v219
        %224 = vrot.lane.b32.xlu0 %v196, 124
        %v225 = vpop.permute.xlu0 %224
        %226 = vrot.lane.b32.xlu0 %v197, 124
        %v227 = vpop.permute.xlu0 %226
        %v230 = vadd.f32 %v222, %v225
        %v231 = vadd.f32 %v223, %v227
        %v232 = vmul.f32 %v162, 25.0
        %v233 = vmul.f32 %v163, 25.0
        %vm236 = vcmask 1041408
        %v237 = vrot.slane %v230, 6
        %v238 = vrot.slane %v231, 6
        %v239 = vsel %vm236, %v237, %v238
        %240 = vrot.lane.b32.xlu0 %v237, 2
        %v241 = vpop.permute.xlu0 %240
        %242 = vrot.lane.b32.xlu0 %v239, 2
        %v243 = vpop.permute.xlu0 %242
        %v246 = vsub.f32 %v232, %v241
        %v247 = vsub.f32 %v233, %v243
        %v248 = vmul.f32 %v246, %v246
        %v249 = vmul.f32 %v247, %v247
        %v252 = vrot.slane %v248, 2
        %v253 = vrot.slane %v249, 2
        %v254 = vsel %vm174, %v252, %v253
        %255 = vrot.lane.b32.xlu0 %v254, 126
        %v256 = vpop.permute.xlu0 %255
        %257 = vrot.lane.b32.xlu0 %v253, 126
        %v258 = vpop.permute.xlu0 %257
        %vm261 = vcmask 97280
        %v262 = vsel %vm261, %v256, 0.0
        %vm263 = vcmask 93184
        %v264 = vsel %vm263, %v258, 0.0
        %v265 = vadd.f32 %v262, %v264
        %266 = vadd.xlane.f32.xlu0 %v265
        %v267 = vpop.xlane.xlu0 %266
        %v268 = vrot.slane %v267, 4
        %v269 = vadd.f32 %v267, %v268
        %v270 = vrot.slane %v269, 2
        %v271 = vadd.f32 %v269, %v270
        %v272 = vrot.slane %v271, 1
        %v273 = vadd.f32 %v271, %v272
        %s274 = vtos %v273
        %s275 = smul.f32 %s274, 3.4722223e-07
        %v276 = vstv %s275
        %vm277 = vcmask 0
        %278 = vst.msk [vmem:[%s148] sm:$0x1] %vm277, %v276
        %s279 = sand.u32 %s66, 1
        %s280 = scalar_lea.sflag [#allocation4], %s279
        %s281 = sand.u32 %s66, 1
        %s282 = scalar_lea.vmem [#allocation5], %s281
        // Predicated region
        $region29: #{tpu_custom_call.1} parent=23 // pred_check
          %p283 = pneg %p76
        $region30: #{tpu_custom_call.1} parent=23 // pred_check_branch
          %285 = sbr.rel (%p283) target = $region32
        $region31: #{tpu_custom_call.1} parent=23 // pred_region
          %s287 = ssub.s32 16, 16
          %288 = vsyncadd %s280, %s287
          %s289 = smul.addr %s22, 16
          %s290 = scalar_lea.hbm %s1, %s289
          %s292 = sshll.u32 %s282, 4
          %s293 = int_to_ptr.vmem [resolvable:$true] %s292
          %295 = dma.vmem_to_hbm [thread:$0]  %s293, 16, %s290, %s280
        $region32: #{tpu_custom_call.1} parent=23 // pred_fallthru
          _
      $region24: #{tpu_custom_call.1} parent=5 // pred_fallthru
        _
      %p296 = scmp.le.s32.totalorder 2, %s13
      // Predicated region
      $region33: #{tpu_custom_call.1} parent=5 // pred_check
        %p297 = pneg %p296
      $region34: #{tpu_custom_call.1} parent=5 // pred_check_branch
        %299 = sbr.rel (%p297) target = $region36
      $region35: #{tpu_custom_call.1} parent=5 // pred_region
        %s300 = ssub.s32 %s13, 2
        // Predicated region
        $region37: #{tpu_custom_call.1} parent=35 // pred_check
          %p301 = pneg %p82
        $region38: #{tpu_custom_call.1} parent=35 // pred_check_branch
          %303 = sbr.rel (%p301) target = $region40
        $region39: #{tpu_custom_call.1} parent=35 // pred_region
          %s304 = sand.u32 %s67, 1
          %s305 = scalar_lea.sflag [#allocation4], %s304
          %s306 = sand.u32 %s67, 1
          %s307 = scalar_lea.vmem [#allocation5], %s306
          %308 = dma.done %s305, 16
        $region40: #{tpu_custom_call.1} parent=35 // pred_fallthru
          _
      $region36: #{tpu_custom_call.1} parent=5 // pred_fallthru
        _
    $region6: #{tpu_custom_call.1} parent=1 // loop_footer
      %s17 = sadd.s32 1, %s13
    $region7: #{tpu_custom_call.1} parent=1 // loop_footer_branch
      %12 = sbr.rel target = $region3
    $region8: #{tpu_custom_call.1} parent=1 // loop_exit
      _
    %309 = vsyncpa [#allocation3], 1
    %s310 = scalar_lea.sflag [#allocation3], 1
    %311 = vsyncpa %s310, 1
    %312 = vsyncpa [#allocation4], 1
    %s313 = scalar_lea.sflag [#allocation4], 1
    %314 = vsyncpa %s313, 1

</llo_original>
